<compile_context>
chip_gen: v5e
topology: v5e:2x2
jax: 0.10.0
libtpu: 0.0.40
codegen_flags: <defaults>
</compile_context>

<pallas_src>
import jax
import jax.numpy as jnp
import numpy as np
from jax.experimental import pallas as pl
from jax.experimental.pallas import tpu as pltpu

NUM_CLASSES = 14
NUM_DOMAINS = 2
NUM_HEAD_OUT = NUM_CLASSES + NUM_DOMAINS  # 16
NEG_BIG = -1e30  # "minus infinity" that stays NaN-free under subtraction


def _round_up(v, m):
    return ((v + m - 1) // m) * m


def m_kernel(x_ref, y_ref, dl_ref,
             w1_ref, b1_ref, w2_ref, b2_ref,
             wh_ref, bh_ref,
             out_ref, rloss_ref, pred_ref):
    x = x_ref[...]                                               # (TB, 256) f32

    # fc1 + ReLU
    h1 = jnp.dot(x, w1_ref[...], preferred_element_type=jnp.float32) + b1_ref[...]
    h1 = jnp.maximum(h1, 0.0)

    # fc2 -> "output" tile.  The head matmul below reads h1 (weights were
    # pre-composed with w2 in the wrapper), so these two MXU ops are independent.
    h2 = jnp.dot(h1, w2_ref[...], preferred_element_type=jnp.float32) + b2_ref[...]
    out_ref[...] = h2.astype(out_ref.dtype)

    # Fused + pre-composed heads: (TB,256) @ (256,16).
    # Lanes [0,14) = classifier logits, lanes [14,16) = domain logits.
    logits = jnp.dot(h1, wh_ref[...], preferred_element_type=jnp.float32) + bh_ref[...]

    lane = jax.lax.broadcasted_iota(jnp.int32, logits.shape, 1)  # (TB, 16)
    mask_c = lane < NUM_CLASSES

    # --- classifier log-sum-exp (row max reused by argmax below) ---
    lc = jnp.where(mask_c, logits, NEG_BIG)
    m_c = jnp.max(lc, axis=-1, keepdims=True)
    lse_c = m_c + jnp.log(jnp.sum(jnp.exp(lc - m_c), axis=-1, keepdims=True))

    # --- domain log-sum-exp ---
    ld = jnp.where(mask_c, NEG_BIG, logits)
    m_d = jnp.max(ld, axis=-1, keepdims=True)
    lse_d = m_d + jnp.log(jnp.sum(jnp.exp(ld - m_d), axis=-1, keepdims=True))

    # Single fused "picked logit" reduction: the class target lane (< 14) and
    # the domain target lane (>= 14) are disjoint, so one masked sum gives
    # picked_c + picked_d.
    tgt = (lane == y_ref[...]) | (lane == dl_ref[...] + NUM_CLASSES)
    picked = jnp.sum(jnp.where(tgt, logits, 0.0), axis=-1, keepdims=True)

    # Per-row loss partials; the wrapper slices off padded rows and takes the
    # batch mean (equals CE_class_mean + CE_domain_mean).
    rloss_ref[...] = lse_c + lse_d - picked                      # (TB, 1)

    # argmax(softmax) == argmax(logits); first-max-wins like torch.argmax.
    cand = jnp.where((logits == m_c) & mask_c,
                     lane.astype(jnp.float32),
                     jnp.float32(NUM_HEAD_OUT))
    pred_ref[...] = jnp.min(cand, axis=-1, keepdims=True).astype(jnp.int32)


def m_forward(x, y, domain_label, params, *, tb=None):
    B, D = x.shape
    assert D == 256
    (w1, b1, w2, b2, wc, bc, wd, bd) = params

    # Batch tile: multiple of 8 sublanes, capped so VMEM stays small on every
    # TPU generation (v7x 64 MiB physical, v5e 16 MiB default scoped).
    if tb is None:
        tb = min(512, _round_up(B, 8))
    num_tiles = pl.cdiv(B, tb)
    Bp = num_tiles * tb

    y = y.astype(jnp.int32)
    domain_label = domain_label.astype(jnp.int32)
    if Bp != B:
        pad = Bp - B
        x = jnp.pad(x, ((0, pad), (0, 0)))
        y = jnp.pad(y, (0, pad))
        domain_label = jnp.pad(domain_label, (0, pad))

    # Fuse classifier + domain heads and pre-compose them with fc2 so the head
    # matmul inside the kernel depends only on h1.
    w_heads = jnp.concatenate([wc, wd], axis=1)                  # (256, 16)
    b_heads = jnp.concatenate([bc, bd], axis=0)                  # (16,)
    wh = w2 @ w_heads                                            # (256, 16)
    bh = (b2 @ w_heads + b_heads).reshape(1, -1)                 # (1, 16)

    grid_spec = pltpu.PrefetchScalarGridSpec(
        num_scalar_prefetch=0,
        grid=(num_tiles,),
        in_specs=[
            pl.BlockSpec((tb, 256), lambda i: (i, 0)),           # x tile
            pl.BlockSpec((tb, 1), lambda i: (i, 0)),             # y tile
            pl.BlockSpec((tb, 1), lambda i: (i, 0)),             # domain_label tile
            pl.BlockSpec((256, 256), lambda i: (0, 0)),          # w1 (resident)
            pl.BlockSpec((1, 256), lambda i: (0, 0)),            # b1
            pl.BlockSpec((256, 256), lambda i: (0, 0)),          # w2
            pl.BlockSpec((1, 256), lambda i: (0, 0)),            # b2
            pl.BlockSpec((256, NUM_HEAD_OUT), lambda i: (0, 0)),  # fused head W
            pl.BlockSpec((1, NUM_HEAD_OUT), lambda i: (0, 0)),    # fused head b
        ],
        out_specs=[
            pl.BlockSpec((tb, 256), lambda i: (i, 0)),           # output (lane-dense)
            pl.BlockSpec((tb, 1), lambda i: (i, 0)),             # per-row loss
            pl.BlockSpec((tb, 1), lambda i: (i, 0)),             # pred column
        ],
    )

    out, rloss, pred = pl.pallas_call(
        m_kernel,
        grid_spec=grid_spec,
        out_shape=(
            jax.ShapeDtypeStruct((Bp, 256), jnp.float32),
            jax.ShapeDtypeStruct((Bp, 1), jnp.float32),
            jax.ShapeDtypeStruct((Bp, 1), jnp.int32),
        ),
        compiler_params=pltpu.CompilerParams(
            dimension_semantics=("parallel",),      # lets v7x use both TCs
            vmem_limit_bytes=32 * 1024 * 1024,
        ),
    )(
        x,
        y.reshape(Bp, 1),
        domain_label.reshape(Bp, 1),
        w1, b1.reshape(1, -1),
        w2, b2.reshape(1, -1),
        wh, bh,
    )

    loss = jnp.sum(rloss[:B, 0]) / B
    return out[:B], loss, pred[:B, 0]


def init_params(key):
    # PyTorch-Linear-style uniform(-1/sqrt(fan_in), 1/sqrt(fan_in)) init.
    # Weights stored transposed as (in_features, out_features).
    def linear(k, fan_in, fan_out):
        kw, kb = jax.random.split(k)
        bound = 1.0 / jnp.sqrt(jnp.float32(fan_in))
        w = jax.random.uniform(kw, (fan_in, fan_out), jnp.float32, -bound, bound)
        b = jax.random.uniform(kb, (fan_out,), jnp.float32, -bound, bound)
        return w, b

    k1, k2, k3, k4 = jax.random.split(key, 4)
    w1, b1 = linear(k1, 256, 256)
    w2, b2 = linear(k2, 256, 256)
    wc, bc = linear(k3, 256, NUM_CLASSES)
    wd, bd = linear(k4, 256, NUM_DOMAINS)
    return (w1, b1, w2, b2, wc, bc, wd, bd)


def reference_forward(x, y, dl, params):
    (w1, b1, w2, b2, wc, bc, wd, bd) = params
    h1 = jnp.maximum(x @ w1 + b1, 0.0)
    out = h1 @ w2 + b2
    logits = out @ wc + bc
    dlogits = out @ wd + bd

    def ce(l, t):
        lse = jax.scipy.special.logsumexp(l, axis=-1)
        picked = jnp.take_along_axis(l, t[:, None], axis=-1)[:, 0]
        return jnp.mean(lse - picked)

    loss = ce(logits, y) + ce(dlogits, dl)
    pred = jnp.argmax(logits, axis=-1).astype(jnp.int32)
    return out, loss, pred


if __name__ == "__main__":
    key = jax.random.PRNGKey(0)
    kp, kx, ky, kd = jax.random.split(key, 4)

    B = 8
    params = init_params(kp)
    x = jax.random.normal(kx, (B, 256), jnp.float32)
    y = jax.random.randint(ky, (B,), 0, NUM_CLASSES, jnp.int32)
    domain_label = jax.random.randint(kd, (B,), 0, NUM_DOMAINS, jnp.int32)

    out, loss, pred = m_forward(x, y, domain_label, params)
    jax.block_until_ready((out, loss, pred))

    assert out.shape == (B, 256) and loss.shape == () and pred.shape == (B,)

    # Correctness vs. pure-JAX reference (loose tolerance: the head weights are
    # pre-composed with fc2, so rounding differs slightly from the 2-matmul path).
    out_r, loss_r, pred_r = reference_forward(x, y, domain_label, params)
    np.testing.assert_allclose(np.asarray(out), np.asarray(out_r), atol=1e-3, rtol=1e-3)
    np.testing.assert_allclose(float(loss), float(loss_r), atol=1e-3, rtol=1e-3)
    assert np.array_equal(np.asarray(pred), np.asarray(pred_r))

    print("KERNEL_OK")
</pallas_src>

<mosaic_0001>
module attributes {stable_mosaic.version = 11 : i64} {
  func.func @m_kernel(%arg0: i32, %arg1: memref<8x256xf32, #tpu.memory_space<vmem>>, %arg2: memref<8x1xi32, #tpu.memory_space<vmem>>, %arg3: memref<8x1xi32, #tpu.memory_space<vmem>>, %arg4: memref<256x256xf32, #tpu.memory_space<vmem>>, %arg5: memref<1x256xf32, #tpu.memory_space<vmem>>, %arg6: memref<256x256xf32, #tpu.memory_space<vmem>>, %arg7: memref<1x256xf32, #tpu.memory_space<vmem>>, %arg8: memref<256x16xf32, #tpu.memory_space<vmem>>, %arg9: memref<1x16xf32, #tpu.memory_space<vmem>>, %arg10: memref<8x256xf32, #tpu.memory_space<vmem>>, %arg11: memref<8x1xf32, #tpu.memory_space<vmem>>, %arg12: memref<8x1xi32, #tpu.memory_space<vmem>>) attributes {dimension_semantics = [#tpu.dimension_semantics<parallel>], iteration_bounds = array<i64: 1>, scalar_prefetch = 0 : i64, scratch_operands = 0 : i64, tpu.core_type = #tpu.core_type<tc>, window_params = [{transform_indices = @transform_0, window_bounds = array<i64: 8, 256>}, {transform_indices = @transform_1, window_bounds = array<i64: 8, 1>}, {transform_indices = @transform_2, window_bounds = array<i64: 8, 1>}, {pipeline_mode = #tpu.pipeline_mode<synchronous>, transform_indices = @transform_3, window_bounds = array<i64: 256, 256>}, {pipeline_mode = #tpu.pipeline_mode<synchronous>, transform_indices = @transform_4, window_bounds = array<i64: 1, 256>}, {pipeline_mode = #tpu.pipeline_mode<synchronous>, transform_indices = @transform_5, window_bounds = array<i64: 256, 256>}, {pipeline_mode = #tpu.pipeline_mode<synchronous>, transform_indices = @transform_6, window_bounds = array<i64: 1, 256>}, {pipeline_mode = #tpu.pipeline_mode<synchronous>, transform_indices = @transform_7, window_bounds = array<i64: 256, 16>}, {pipeline_mode = #tpu.pipeline_mode<synchronous>, transform_indices = @transform_8, window_bounds = array<i64: 1, 16>}, {transform_indices = @transform_9, window_bounds = array<i64: 8, 256>}, {transform_indices = @transform_10, window_bounds = array<i64: 8, 1>}, {transform_indices = @transform_11, window_bounds = array<i64: 8, 1>}]} {
    %c0 = arith.constant 0 : index
    %c0_0 = arith.constant 0 : index
    %0 = vector.load %arg1[%c0, %c0_0] : memref<8x256xf32, #tpu.memory_space<vmem>>, vector<8x256xf32>
    %c0_1 = arith.constant 0 : index
    %c0_2 = arith.constant 0 : index
    %1 = vector.load %arg4[%c0_1, %c0_2] : memref<256x256xf32, #tpu.memory_space<vmem>>, vector<256x256xf32>
    %cst = arith.constant dense<0.000000e+00> : vector<8x256xf32>
    %2 = tpu.matmul %0, %1, %cst {dimension_numbers = #tpu.dot_dimension_numbers<[1], [0], [0], [1], [0, 0, 1, 1], [], []>} : vector<8x256xf32>, vector<256x256xf32>, vector<8x256xf32> -> vector<8x256xf32>
    %c0_3 = arith.constant 0 : index
    %c0_4 = arith.constant 0 : index
    %3 = vector.load %arg5[%c0_3, %c0_4] : memref<1x256xf32, #tpu.memory_space<vmem>>, vector<1x256xf32>
    %4 = vector.broadcast %3 : vector<1x256xf32> to vector<8x256xf32>
    %5 = arith.addf %2, %4 : vector<8x256xf32>
    %cst_5 = arith.constant 0.000000e+00 : f32
    %6 = vector.broadcast %cst_5 : f32 to vector<8x256xf32>
    %7 = arith.maximumf %5, %6 : vector<8x256xf32>
    %c0_6 = arith.constant 0 : index
    %c0_7 = arith.constant 0 : index
    %8 = vector.load %arg6[%c0_6, %c0_7] : memref<256x256xf32, #tpu.memory_space<vmem>>, vector<256x256xf32>
    %cst_8 = arith.constant dense<0.000000e+00> : vector<8x256xf32>
    %9 = tpu.matmul %7, %8, %cst_8 {dimension_numbers = #tpu.dot_dimension_numbers<[1], [0], [0], [1], [0, 0, 1, 1], [], []>} : vector<8x256xf32>, vector<256x256xf32>, vector<8x256xf32> -> vector<8x256xf32>
    %c0_9 = arith.constant 0 : index
    %c0_10 = arith.constant 0 : index
    %10 = vector.load %arg7[%c0_9, %c0_10] : memref<1x256xf32, #tpu.memory_space<vmem>>, vector<1x256xf32>
    %11 = vector.broadcast %10 : vector<1x256xf32> to vector<8x256xf32>
    %12 = arith.addf %9, %11 : vector<8x256xf32>
    %c0_11 = arith.constant 0 : index
    %c0_12 = arith.constant 0 : index
    %13 = vector.load %arg10[%c0_11, %c0_12] : memref<8x256xf32, #tpu.memory_space<vmem>>, vector<8x256xf32>
    tpu.vector_store %arg10[%c0_11, %c0_12], %12 {strides = array<i32>} : memref<8x256xf32, #tpu.memory_space<vmem>>, vector<8x256xf32>,
    %c0_13 = arith.constant 0 : index
    %c0_14 = arith.constant 0 : index
    %14 = vector.load %arg8[%c0_13, %c0_14] : memref<256x16xf32, #tpu.memory_space<vmem>>, vector<256x16xf32>
    %cst_15 = arith.constant dense<0.000000e+00> : vector<8x16xf32>
    %15 = tpu.matmul %7, %14, %cst_15 {dimension_numbers = #tpu.dot_dimension_numbers<[1], [0], [0], [1], [0, 0, 1, 1], [], []>} : vector<8x256xf32>, vector<256x16xf32>, vector<8x16xf32> -> vector<8x16xf32>
    %c0_16 = arith.constant 0 : index
    %c0_17 = arith.constant 0 : index
    %16 = vector.load %arg9[%c0_16, %c0_17] : memref<1x16xf32, #tpu.memory_space<vmem>>, vector<1x16xf32>
    %17 = vector.broadcast %16 : vector<1x16xf32> to vector<8x16xf32>
    %18 = arith.addf %15, %17 : vector<8x16xf32>
    %19 = tpu.iota {dimensions = array<i32: 1>} : vector<8x16xi32>
    %c14_i32 = arith.constant 14 : i32
    %20 = vector.broadcast %c14_i32 : i32 to vector<8x16xi32>
    %21 = arith.cmpi slt, %19, %20 : vector<8x16xi32>
    %cst_18 = arith.constant -1.000000e+30 : f32
    %22 = vector.broadcast %cst_18 : f32 to vector<8x16xf32>
    %23 = arith.select %21, %18, %22 : vector<8x16xi1>, vector<8x16xf32>
    %cst_19 = arith.constant dense<0xFF800000> : vector<8xf32>
    %24 = vector.multi_reduction <maximumf>, %23, %cst_19 [1] : vector<8x16xf32> to vector<8xf32>
    %25 = vector.shape_cast %24 : vector<8xf32> to vector<8x1xf32>
    %26 = vector.broadcast %25 : vector<8x1xf32> to vector<8x16xf32>
    %27 = arith.subf %23, %26 : vector<8x16xf32>
    %28 = math.exp %27 : vector<8x16xf32>
    %cst_20 = arith.constant dense<0.000000e+00> : vector<8xf32>
    %29 = vector.multi_reduction <add>, %28, %cst_20 [1] : vector<8x16xf32> to vector<8xf32>
    %30 = vector.shape_cast %29 : vector<8xf32> to vector<8x1xf32>
    %31 = math.log %30 : vector<8x1xf32>
    %32 = arith.addf %25, %31 : vector<8x1xf32>
    %cst_21 = arith.constant -1.000000e+30 : f32
    %33 = vector.broadcast %cst_21 : f32 to vector<8x16xf32>
    %34 = arith.select %21, %33, %18 : vector<8x16xi1>, vector<8x16xf32>
    %cst_22 = arith.constant dense<0xFF800000> : vector<8xf32>
    %35 = vector.multi_reduction <maximumf>, %34, %cst_22 [1] : vector<8x16xf32> to vector<8xf32>
    %36 = vector.shape_cast %35 : vector<8xf32> to vector<8x1xf32>
    %37 = vector.broadcast %36 : vector<8x1xf32> to vector<8x16xf32>
    %38 = arith.subf %34, %37 : vector<8x16xf32>
    %39 = math.exp %38 : vector<8x16xf32>
    %cst_23 = arith.constant dense<0.000000e+00> : vector<8xf32>
    %40 = vector.multi_reduction <add>, %39, %cst_23 [1] : vector<8x16xf32> to vector<8xf32>
    %41 = vector.shape_cast %40 : vector<8xf32> to vector<8x1xf32>
    %42 = math.log %41 : vector<8x1xf32>
    %43 = arith.addf %36, %42 : vector<8x1xf32>
    %c0_24 = arith.constant 0 : index
    %c0_25 = arith.constant 0 : index
    %44 = vector.load %arg2[%c0_24, %c0_25] : memref<8x1xi32, #tpu.memory_space<vmem>>, vector<8x1xi32>
    %45 = vector.broadcast %44 : vector<8x1xi32> to vector<8x16xi32>
    %46 = arith.cmpi eq, %19, %45 : vector<8x16xi32>
    %c0_26 = arith.constant 0 : index
    %c0_27 = arith.constant 0 : index
    %47 = vector.load %arg3[%c0_26, %c0_27] : memref<8x1xi32, #tpu.memory_space<vmem>>, vector<8x1xi32>
    %c14_i32_28 = arith.constant 14 : i32
    %48 = vector.broadcast %c14_i32_28 : i32 to vector<8x1xi32>
    %49 = arith.addi %47, %48 : vector<8x1xi32>
    %50 = vector.broadcast %49 : vector<8x1xi32> to vector<8x16xi32>
    %51 = arith.cmpi eq, %19, %50 : vector<8x16xi32>
    %52 = arith.ori %46, %51 : vector<8x16xi1>
    %cst_29 = arith.constant 0.000000e+00 : f32
    %53 = vector.broadcast %cst_29 : f32 to vector<8x16xf32>
    %54 = arith.select %52, %18, %53 : vector<8x16xi1>, vector<8x16xf32>
    %cst_30 = arith.constant dense<0.000000e+00> : vector<8xf32>
    %55 = vector.multi_reduction <add>, %54, %cst_30 [1] : vector<8x16xf32> to vector<8xf32>
    %56 = vector.shape_cast %55 : vector<8xf32> to vector<8x1xf32>
    %57 = arith.addf %32, %43 : vector<8x1xf32>
    %58 = arith.subf %57, %56 : vector<8x1xf32>
    %c0_31 = arith.constant 0 : index
    %c0_32 = arith.constant 0 : index
    %59 = vector.load %arg11[%c0_31, %c0_32] : memref<8x1xf32, #tpu.memory_space<vmem>>, vector<8x1xf32>
    tpu.vector_store %arg11[%c0_31, %c0_32], %58 {strides = array<i32>} : memref<8x1xf32, #tpu.memory_space<vmem>>, vector<8x1xf32>,
    %60 = vector.broadcast %25 : vector<8x1xf32> to vector<8x16xf32>
    %61 = arith.cmpf oeq, %18, %60 : vector<8x16xf32>
    %62 = arith.andi %61, %21 : vector<8x16xi1>
    %63 = arith.sitofp %19 : vector<8x16xi32> to vector<8x16xf32>
    %cst_33 = arith.constant 1.600000e+01 : f32
    %64 = vector.broadcast %cst_33 : f32 to vector<8x16xf32>
    %65 = arith.select %62, %63, %64 : vector<8x16xi1>, vector<8x16xf32>
    %cst_34 = arith.constant dense<0x7F800000> : vector<8xf32>
    %66 = vector.multi_reduction <minimumf>, %65, %cst_34 [1] : vector<8x16xf32> to vector<8xf32>
    %67 = vector.shape_cast %66 : vector<8xf32> to vector<8x1xf32>
    %68 = arith.fptosi %67 : vector<8x1xf32> to vector<8x1xi32>
    %c0_35 = arith.constant 0 : index
    %c0_36 = arith.constant 0 : index
    %69 = vector.load %arg12[%c0_35, %c0_36] : memref<8x1xi32, #tpu.memory_space<vmem>>, vector<8x1xi32>
    tpu.vector_store %arg12[%c0_35, %c0_36], %68 {strides = array<i32>} : memref<8x1xi32, #tpu.memory_space<vmem>>, vector<8x1xi32>,
    return
  }
  func.func @transform_0(%arg0: i32) -> (i32, i32) {
    %c0_i32 = arith.constant 0 : i32
    %c0_i32_0 = arith.constant 0 : i32
    return %arg0, %c0_i32 : i32, i32
  }
  func.func @transform_1(%arg0: i32) -> (i32, i32) {
    %c0_i32 = arith.constant 0 : i32
    %c0_i32_0 = arith.constant 0 : i32
    return %arg0, %c0_i32 : i32, i32
  }
  func.func @transform_2(%arg0: i32) -> (i32, i32) {
    %c0_i32 = arith.constant 0 : i32
    %c0_i32_0 = arith.constant 0 : i32
    return %arg0, %c0_i32 : i32, i32
  }
  func.func @transform_3(%arg0: i32) -> (i32, i32) {
    %c0_i32 = arith.constant 0 : i32
    %c0_i32_0 = arith.constant 0 : i32
    %c0_i32_1 = arith.constant 0 : i32
    return %c0_i32, %c0_i32_0 : i32, i32
  }
  func.func @transform_4(%arg0: i32) -> (i32, i32) {
    %c0_i32 = arith.constant 0 : i32
    %c0_i32_0 = arith.constant 0 : i32
    %c0_i32_1 = arith.constant 0 : i32
    return %c0_i32, %c0_i32_0 : i32, i32
  }
  func.func @transform_5(%arg0: i32) -> (i32, i32) {
    %c0_i32 = arith.constant 0 : i32
    %c0_i32_0 = arith.constant 0 : i32
    %c0_i32_1 = arith.constant 0 : i32
    return %c0_i32, %c0_i32_0 : i32, i32
  }
  func.func @transform_6(%arg0: i32) -> (i32, i32) {
    %c0_i32 = arith.constant 0 : i32
    %c0_i32_0 = arith.constant 0 : i32
    %c0_i32_1 = arith.constant 0 : i32
    return %c0_i32, %c0_i32_0 : i32, i32
  }
  func.func @transform_7(%arg0: i32) -> (i32, i32) {
    %c0_i32 = arith.constant 0 : i32
    %c0_i32_0 = arith.constant 0 : i32
    %c0_i32_1 = arith.constant 0 : i32
    return %c0_i32, %c0_i32_0 : i32, i32
  }
  func.func @transform_8(%arg0: i32) -> (i32, i32) {
    %c0_i32 = arith.constant 0 : i32
    %c0_i32_0 = arith.constant 0 : i32
    %c0_i32_1 = arith.constant 0 : i32
    return %c0_i32, %c0_i32_0 : i32, i32
  }
  func.func @transform_9(%arg0: i32) -> (i32, i32) {
    %c0_i32 = arith.constant 0 : i32
    %c0_i32_0 = arith.constant 0 : i32
    return %arg0, %c0_i32 : i32, i32
  }
  func.func @transform_10(%arg0: i32) -> (i32, i32) {
    %c0_i32 = arith.constant 0 : i32
    %c0_i32_0 = arith.constant 0 : i32
    return %arg0, %c0_i32 : i32, i32
  }
  func.func @transform_11(%arg0: i32) -> (i32, i32) {
    %c0_i32 = arith.constant 0 : i32
    %c0_i32_0 = arith.constant 0 : i32
    return %arg0, %c0_i32 : i32, i32
  }
}

</mosaic_0001>

<llo_original>
// kernel: tpu_custom_call.1
$region0: #{tpu_custom_call.1}
  #allocation0 [shape = 'u32[]', space=smem, size = 0x4, offset = 0x4, fixed_abs, tag = 'smem constant byte address 0x4 - core index']
  #allocation1 [shape = 'u32[72,128]{1,0:T(1,128)}', space=vmem, size = 0x9000, scoped, tag = 'internal scratch']
  %s0 = inlined_call_operand.vmem [shape: f32[8,256], index: 0, kind: input, shape index: {}]
  %s1 = inlined_call_operand.vmem [shape: s32[8,1], index: 1, kind: input, shape index: {}]
  %s2 = inlined_call_operand.vmem [shape: s32[8,1], index: 2, kind: input, shape index: {}]
  %s3 = inlined_call_operand.hbm [shape: f32[256,256], index: 3, kind: input, shape index: {}]
  %s4 = inlined_call_operand.vmem [shape: f32[1,256], index: 4, kind: input, shape index: {}]
  %s5 = inlined_call_operand.hbm [shape: f32[256,256], index: 5, kind: input, shape index: {}]
  %s6 = inlined_call_operand.vmem [shape: f32[1,256], index: 6, kind: input, shape index: {}]
  %s7 = inlined_call_operand.vmem [shape: f32[256,16], index: 7, kind: input, shape index: {}]
  %s8 = inlined_call_operand.vmem [shape: f32[1,16], index: 8, kind: input, shape index: {}]
  %s9 = inlined_call_operand.hbm [shape: f32[8,256], index: 9, kind: output, shape index: {0}]
  %s10 = inlined_call_operand.vmem [shape: f32[8,1], index: 10, kind: output, shape index: {1}]
  %s11 = inlined_call_operand.vmem [shape: s32[8,1], index: 11, kind: output, shape index: {2}]
  %12 = xla_tuple %s9, %s10, %s11
  %s13 = sld [smem:[#allocation0]]
  $region70: #{tpu_custom_call.1} parent=0
    _
  %s15 = ssub.s32 1, %s13
  %s16 = scalar_select 0, %s15, %s13
  $region1: #{tpu_custom_call.1} parent=0
    #allocation2 [shape = 'u8[262144]{0}', space=vmem, size = 0x40000, scoped, tag = 'input window, operand 3, single buffered']
    #allocation3 [shape = 's32[1]{0}', space=sflag, size = 0x4, scoped, tag = 'scoped memory for tpu_custom_call.1']
    #allocation4 [shape = 's32[1]{0}', space=sflag, size = 0x4, scoped, tag = 'scoped memory for tpu_custom_call.1']
    #allocation5 [shape = 'u8[262144]{0}', space=vmem, size = 0x40000, scoped, tag = 'input window, operand 5, single buffered']
    #allocation6 [shape = 's32[1]{0}', space=sflag, size = 0x4, scoped, tag = 'scoped memory for tpu_custom_call.1']
    #allocation7 [shape = 'u8[8192]{0}', space=vmem, size = 0x2000, scoped, tag = 'output window, operand 0, single buffered']
    %17 = vsyncpa [#allocation3], 0
    %18 = vsyncpa [#allocation6], 0
    %19 = vsyncpa [#allocation4], 0
    // Predicated region
    $region2: #{tpu_custom_call.1} parent=1 // pred_check
      _
    $region3: #{tpu_custom_call.1} parent=1 // pred_check_branch
      %21 = sbr.rel (0) target = $region5
    $region4: #{tpu_custom_call.1} parent=1 // pred_region
      _
    $region5: #{tpu_custom_call.1} parent=1 // pred_fallthru
      _
    // Predicated region
    $region6: #{tpu_custom_call.1} parent=1 // pred_check
      _
    $region7: #{tpu_custom_call.1} parent=1 // pred_check_branch
      %23 = sbr.rel (0) target = $region9
    $region8: #{tpu_custom_call.1} parent=1 // pred_region
      _
    $region9: #{tpu_custom_call.1} parent=1 // pred_fallthru
      _
    // Predicated region
    $region10: #{tpu_custom_call.1} parent=1 // pred_check
      _
    $region11: #{tpu_custom_call.1} parent=1 // pred_check_branch
      %25 = sbr.rel (0) target = $region13
    $region12: #{tpu_custom_call.1} parent=1 // pred_region
      _
    $region13: #{tpu_custom_call.1} parent=1 // pred_fallthru
      _
    // Predicated region
    $region14: #{tpu_custom_call.1} parent=1 // pred_check
      _
    $region15: #{tpu_custom_call.1} parent=1 // pred_check_branch
      %27 = sbr.rel (0) target = $region17
    $region16: #{tpu_custom_call.1} parent=1 // pred_region
      %29 = vsyncadd [#allocation3], 0
      %s30 = sshll.u32 %s3, 4
      %s31 = int_to_ptr.hbm [resolvable:$true] %s30
      %s32 = sshll.u32 [#allocation2], 4
      %s33 = int_to_ptr.vmem [resolvable:$true] %s32
      %38 = dma.hbm_to_vmem [thread:$0]  %s31, 8192, %s33, [#allocation3], 256, 256, 16
    $region17: #{tpu_custom_call.1} parent=1 // pred_fallthru
      _
    // Predicated region
    $region18: #{tpu_custom_call.1} parent=1 // pred_check
      _
    $region19: #{tpu_custom_call.1} parent=1 // pred_check_branch
      %40 = sbr.rel (0) target = $region21
    $region20: #{tpu_custom_call.1} parent=1 // pred_region
      _
    $region21: #{tpu_custom_call.1} parent=1 // pred_fallthru
      _
    // Predicated region
    $region22: #{tpu_custom_call.1} parent=1 // pred_check
      _
    $region23: #{tpu_custom_call.1} parent=1 // pred_check_branch
      %42 = sbr.rel (0) target = $region25
    $region24: #{tpu_custom_call.1} parent=1 // pred_region
      %44 = vsyncadd [#allocation6], 0
      %s45 = sshll.u32 %s5, 4
      %s46 = int_to_ptr.hbm [resolvable:$true] %s45
      %s47 = sshll.u32 [#allocation5], 4
      %s48 = int_to_ptr.vmem [resolvable:$true] %s47
      %53 = dma.hbm_to_vmem [thread:$0]  %s46, 8192, %s48, [#allocation6], 256, 256, 16
    $region25: #{tpu_custom_call.1} parent=1 // pred_fallthru
      _
    // Predicated region
    $region26: #{tpu_custom_call.1} parent=1 // pred_check
      _
    $region27: #{tpu_custom_call.1} parent=1 // pred_check_branch
      %55 = sbr.rel (0) target = $region29
    $region28: #{tpu_custom_call.1} parent=1 // pred_region
      _
    $region29: #{tpu_custom_call.1} parent=1 // pred_fallthru
      _
    // Predicated region
    $region30: #{tpu_custom_call.1} parent=1 // pred_check
      _
    $region31: #{tpu_custom_call.1} parent=1 // pred_check_branch
      %57 = sbr.rel (0) target = $region33
    $region32: #{tpu_custom_call.1} parent=1 // pred_region
      _
    $region33: #{tpu_custom_call.1} parent=1 // pred_fallthru
      _
    // Predicated region
    $region34: #{tpu_custom_call.1} parent=1 // pred_check
      _
    $region35: #{tpu_custom_call.1} parent=1 // pred_check_branch
      %59 = sbr.rel (0) target = $region37
    $region36: #{tpu_custom_call.1} parent=1 // pred_region
      _
    $region37: #{tpu_custom_call.1} parent=1 // pred_fallthru
      _
    // Predicated region
    $region38: #{tpu_custom_call.1} parent=1 // pred_check
      _
    $region39: #{tpu_custom_call.1} parent=1 // pred_check_branch
      %61 = sbr.rel (0) target = $region41
    $region40: #{tpu_custom_call.1} parent=1 // pred_region
      %63 = dma.done [#allocation3], 8192
    $region41: #{tpu_custom_call.1} parent=1 // pred_fallthru
      _
    // Predicated region
    $region42: #{tpu_custom_call.1} parent=1 // pred_check
      _
    $region43: #{tpu_custom_call.1} parent=1 // pred_check_branch
      %65 = sbr.rel (0) target = $region45
    $region44: #{tpu_custom_call.1} parent=1 // pred_region
      %67 = dma.done [#allocation6], 8192
    $region45: #{tpu_custom_call.1} parent=1 // pred_fallthru
      _
    %v68 = vld [vmem:[%s0] sm:$0xff]
    %v69 = vld [vmem:[%s0 + $0x8] sm:$0xff]
    %v70 = vld [vmem:[#allocation2] sm:$0xff]
    %v71 = vld [vmem:[#allocation2 + $0x8] sm:$0xff]
    %v72 = vld [vmem:[#allocation2 + $0x10] sm:$0xff]
    %v73 = vld [vmem:[#allocation2 + $0x18] sm:$0xff]
    %v74 = vld [vmem:[#allocation2 + $0x20] sm:$0xff]
    %v75 = vld [vmem:[#allocation2 + $0x28] sm:$0xff]
    %v76 = vld [vmem:[#allocation2 + $0x30] sm:$0xff]
    %v77 = vld [vmem:[#allocation2 + $0x38] sm:$0xff]
    %v78 = vld [vmem:[#allocation2 + $0x40] sm:$0xff]
    %v79 = vld [vmem:[#allocation2 + $0x48] sm:$0xff]
    %v80 = vld [vmem:[#allocation2 + $0x50] sm:$0xff]
    %v81 = vld [vmem:[#allocation2 + $0x58] sm:$0xff]
    %v82 = vld [vmem:[#allocation2 + $0x60] sm:$0xff]
    %v83 = vld [vmem:[#allocation2 + $0x68] sm:$0xff]
    %v84 = vld [vmem:[#allocation2 + $0x70] sm:$0xff]
    %v85 = vld [vmem:[#allocation2 + $0x78] sm:$0xff]
    %v86 = vld [vmem:[#allocation2 + $0x80] sm:$0xff]
    %v87 = vld [vmem:[#allocation2 + $0x88] sm:$0xff]
    %v88 = vld [vmem:[#allocation2 + $0x90] sm:$0xff]
    %v89 = vld [vmem:[#allocation2 + $0x98] sm:$0xff]
    %v90 = vld [vmem:[#allocation2 + $0xa0] sm:$0xff]
    %v91 = vld [vmem:[#allocation2 + $0xa8] sm:$0xff]
    %v92 = vld [vmem:[#allocation2 + $0xb0] sm:$0xff]
    %v93 = vld [vmem:[#allocation2 + $0xb8] sm:$0xff]
    %v94 = vld [vmem:[#allocation2 + $0xc0] sm:$0xff]
    %v95 = vld [vmem:[#allocation2 + $0xc8] sm:$0xff]
    %v96 = vld [vmem:[#allocation2 + $0xd0] sm:$0xff]
    %v97 = vld [vmem:[#allocation2 + $0xd8] sm:$0xff]
    %v98 = vld [vmem:[#allocation2 + $0xe0] sm:$0xff]
    %v99 = vld [vmem:[#allocation2 + $0xe8] sm:$0xff]
    %v100 = vld [vmem:[#allocation2 + $0xf0] sm:$0xff]
    %v101 = vld [vmem:[#allocation2 + $0xf8] sm:$0xff]
    %v102 = vld [vmem:[#allocation2 + $0x100] sm:$0xff]
    %v103 = vld [vmem:[#allocation2 + $0x108] sm:$0xff]
    %v104 = vld [vmem:[#allocation2 + $0x110] sm:$0xff]
    %v105 = vld [vmem:[#allocation2 + $0x118] sm:$0xff]
    %v106 = vld [vmem:[#allocation2 + $0x120] sm:$0xff]
    %v107 = vld [vmem:[#allocation2 + $0x128] sm:$0xff]
    %v108 = vld [vmem:[#allocation2 + $0x130] sm:$0xff]
    %v109 = vld [vmem:[#allocation2 + $0x138] sm:$0xff]
    %v110 = vld [vmem:[#allocation2 + $0x140] sm:$0xff]
    %v111 = vld [vmem:[#allocation2 + $0x148] sm:$0xff]
    %v112 = vld [vmem:[#allocation2 + $0x150] sm:$0xff]
    %v113 = vld [vmem:[#allocation2 + $0x158] sm:$0xff]
    %v114 = vld [vmem:[#allocation2 + $0x160] sm:$0xff]
    %v115 = vld [vmem:[#allocation2 + $0x168] sm:$0xff]
    %v116 = vld [vmem:[#allocation2 + $0x170] sm:$0xff]
    %v117 = vld [vmem:[#allocation2 + $0x178] sm:$0xff]
    %v118 = vld [vmem:[#allocation2 + $0x180] sm:$0xff]
    %v119 = vld [vmem:[#allocation2 + $0x188] sm:$0xff]
    %v120 = vld [vmem:[#allocation2 + $0x190] sm:$0xff]
    %v121 = vld [vmem:[#allocation2 + $0x198] sm:$0xff]
    %v122 = vld [vmem:[#allocation2 + $0x1a0] sm:$0xff]
    %v123 = vld [vmem:[#allocation2 + $0x1a8] sm:$0xff]
    %v124 = vld [vmem:[#allocation2 + $0x1b0] sm:$0xff]
    %v125 = vld [vmem:[#allocation2 + $0x1b8] sm:$0xff]
    %v126 = vld [vmem:[#allocation2 + $0x1c0] sm:$0xff]
    %v127 = vld [vmem:[#allocation2 + $0x1c8] sm:$0xff]
    %v128 = vld [vmem:[#allocation2 + $0x1d0] sm:$0xff]
    %v129 = vld [vmem:[#allocation2 + $0x1d8] sm:$0xff]
    %v130 = vld [vmem:[#allocation2 + $0x1e0] sm:$0xff]
    %v131 = vld [vmem:[#allocation2 + $0x1e8] sm:$0xff]
    %v132 = vld [vmem:[#allocation2 + $0x1f0] sm:$0xff]
    %v133 = vld [vmem:[#allocation2 + $0x1f8] sm:$0xff]
    %v134 = vld [vmem:[%s4] sm:$0x3]
    %v136 = vperm.slane %v134, 0
    %v137 = vperm.slane %v134, 1
    %140 = vmatpush.msra.mxu0 %v100
    %141 = vmatpush.msra.mxu0 %v98
    %142 = vmatpush.msra.mxu0 %v96
    %143 = vmatpush.msra.mxu0 %v94
    %144 = vmatpush.msra.mxu0 %v92
    %145 = vmatpush.msra.mxu0 %v90
    %146 = vmatpush.msra.mxu0 %v88
    %147 = vmatpush.msra.mxu0 %v86
    %148 = vmatpush.msra.mxu0 %v84
    %149 = vmatpush.msra.mxu0 %v82
    %150 = vmatpush.msra.mxu0 %v80
    %151 = vmatpush.msra.mxu0 %v78
    %152 = vmatpush.msra.mxu0 %v76
    %153 = vmatpush.msra.mxu0 %v74
    %154 = vmatpush.msra.mxu0 %v72
    %155 = vmatpush.msra.mxu0 %v70
    %156 = vmatmul.f32.gmra.mxu0 %v68
    %v157 = vpop.f32.mrf.mxu0
    %v158 = vadd.f32 %v136, %v157
    %159 = vdwg.mxu0
    %160 = vmatpush.msra.mxu0 %v132
    %161 = vmatpush.msra.mxu0 %v130
    %162 = vmatpush.msra.mxu0 %v128
    %163 = vmatpush.msra.mxu0 %v126
    %164 = vmatpush.msra.mxu0 %v124
    %165 = vmatpush.msra.mxu0 %v122
    %166 = vmatpush.msra.mxu0 %v120
    %167 = vmatpush.msra.mxu0 %v118
    %168 = vmatpush.msra.mxu0 %v116
    %169 = vmatpush.msra.mxu0 %v114
    %170 = vmatpush.msra.mxu0 %v112
    %171 = vmatpush.msra.mxu0 %v110
    %172 = vmatpush.msra.mxu0 %v108
    %173 = vmatpush.msra.mxu0 %v106
    %174 = vmatpush.msra.mxu0 %v104
    %175 = vmatpush.msra.mxu0 %v102
    %176 = vmatmul.f32.gmra.mxu0 %v69
    %v177 = vpop.f32.mrf.mxu0
    %v178 = vadd.f32 %v158, %v177
    %179 = vdwg.mxu0
    %180 = vmatpush.msra.mxu0 %v101
    %181 = vmatpush.msra.mxu0 %v99
    %182 = vmatpush.msra.mxu0 %v97
    %183 = vmatpush.msra.mxu0 %v95
    %184 = vmatpush.msra.mxu0 %v93
    %185 = vmatpush.msra.mxu0 %v91
    %186 = vmatpush.msra.mxu0 %v89
    %187 = vmatpush.msra.mxu0 %v87
    %188 = vmatpush.msra.mxu0 %v85
    %189 = vmatpush.msra.mxu0 %v83
    %190 = vmatpush.msra.mxu0 %v81
    %191 = vmatpush.msra.mxu0 %v79
    %192 = vmatpush.msra.mxu0 %v77
    %193 = vmatpush.msra.mxu0 %v75
    %194 = vmatpush.msra.mxu0 %v73
    %195 = vmatpush.msra.mxu0 %v71
    %196 = vmatmul.f32.gmra.mxu0 %v68
    %v197 = vpop.f32.mrf.mxu0
    %v198 = vadd.f32 %v137, %v197
    %199 = vdwg.mxu0
    %200 = vmatpush.msra.mxu0 %v133
    %201 = vmatpush.msra.mxu0 %v131
    %202 = vmatpush.msra.mxu0 %v129
    %203 = vmatpush.msra.mxu0 %v127
    %204 = vmatpush.msra.mxu0 %v125
    %205 = vmatpush.msra.mxu0 %v123
    %206 = vmatpush.msra.mxu0 %v121
    %207 = vmatpush.msra.mxu0 %v119
    %208 = vmatpush.msra.mxu0 %v117
    %209 = vmatpush.msra.mxu0 %v115
    %210 = vmatpush.msra.mxu0 %v113
    %211 = vmatpush.msra.mxu0 %v111
    %212 = vmatpush.msra.mxu0 %v109
    %213 = vmatpush.msra.mxu0 %v107
    %214 = vmatpush.msra.mxu0 %v105
    %215 = vmatpush.msra.mxu0 %v103
    %216 = vmatmul.f32.gmra.mxu0 %v69
    %v217 = vpop.f32.mrf.mxu0
    %v218 = vadd.f32 %v198, %v217
    %219 = vdwg.mxu0
    %v220 = vmax.f32 %v178, 0.0
    %v221 = vmax.f32 %v218, 0.0
    %v222 = vld [vmem:[#allocation5] sm:$0xff]
    %v223 = vld [vmem:[#allocation5 + $0x8] sm:$0xff]
    %v224 = vld [vmem:[#allocation5 + $0x10] sm:$0xff]
    %v225 = vld [vmem:[#allocation5 + $0x18] sm:$0xff]
    %v226 = vld [vmem:[#allocation5 + $0x20] sm:$0xff]
    %v227 = vld [vmem:[#allocation5 + $0x28] sm:$0xff]
    %v228 = vld [vmem:[#allocation5 + $0x30] sm:$0xff]
    %v229 = vld [vmem:[#allocation5 + $0x38] sm:$0xff]
    %v230 = vld [vmem:[#allocation5 + $0x40] sm:$0xff]
    %v231 = vld [vmem:[#allocation5 + $0x48] sm:$0xff]
    %v232 = vld [vmem:[#allocation5 + $0x50] sm:$0xff]
    %v233 = vld [vmem:[#allocation5 + $0x58] sm:$0xff]
    %v234 = vld [vmem:[#allocation5 + $0x60] sm:$0xff]
    %v235 = vld [vmem:[#allocation5 + $0x68] sm:$0xff]
    %v236 = vld [vmem:[#allocation5 + $0x70] sm:$0xff]
    %v237 = vld [vmem:[#allocation5 + $0x78] sm:$0xff]
    %v238 = vld [vmem:[#allocation5 + $0x80] sm:$0xff]
    %v239 = vld [vmem:[#allocation5 + $0x88] sm:$0xff]
    %v240 = vld [vmem:[#allocation5 + $0x90] sm:$0xff]
    %v241 = vld [vmem:[#allocation5 + $0x98] sm:$0xff]
    %v242 = vld [vmem:[#allocation5 + $0xa0] sm:$0xff]
    %v243 = vld [vmem:[#allocation5 + $0xa8] sm:$0xff]
    %v244 = vld [vmem:[#allocation5 + $0xb0] sm:$0xff]
    %v245 = vld [vmem:[#allocation5 + $0xb8] sm:$0xff]
    %v246 = vld [vmem:[#allocation5 + $0xc0] sm:$0xff]
    %v247 = vld [vmem:[#allocation5 + $0xc8] sm:$0xff]
    %v248 = vld [vmem:[#allocation5 + $0xd0] sm:$0xff]
    %v249 = vld [vmem:[#allocation5 + $0xd8] sm:$0xff]
    %v250 = vld [vmem:[#allocation5 + $0xe0] sm:$0xff]
    %v251 = vld [vmem:[#allocation5 + $0xe8] sm:$0xff]
    %v252 = vld [vmem:[#allocation5 + $0xf0] sm:$0xff]
    %v253 = vld [vmem:[#allocation5 + $0xf8] sm:$0xff]
    %v254 = vld [vmem:[#allocation5 + $0x100] sm:$0xff]
    %v255 = vld [vmem:[#allocation5 + $0x108] sm:$0xff]
    %v256 = vld [vmem:[#allocation5 + $0x110] sm:$0xff]
    %v257 = vld [vmem:[#allocation5 + $0x118] sm:$0xff]
    %v258 = vld [vmem:[#allocation5 + $0x120] sm:$0xff]
    %v259 = vld [vmem:[#allocation5 + $0x128] sm:$0xff]
    %v260 = vld [vmem:[#allocation5 + $0x130] sm:$0xff]
    %v261 = vld [vmem:[#allocation5 + $0x138] sm:$0xff]
    %v262 = vld [vmem:[#allocation5 + $0x140] sm:$0xff]
    %v263 = vld [vmem:[#allocation5 + $0x148] sm:$0xff]
    %v264 = vld [vmem:[#allocation5 + $0x150] sm:$0xff]
    %v265 = vld [vmem:[#allocation5 + $0x158] sm:$0xff]
    %v266 = vld [vmem:[#allocation5 + $0x160] sm:$0xff]
    %v267 = vld [vmem:[#allocation5 + $0x168] sm:$0xff]
    %v268 = vld [vmem:[#allocation5 + $0x170] sm:$0xff]
    %v269 = vld [vmem:[#allocation5 + $0x178] sm:$0xff]
    %v270 = vld [vmem:[#allocation5 + $0x180] sm:$0xff]
    %v271 = vld [vmem:[#allocation5 + $0x188] sm:$0xff]
    %v272 = vld [vmem:[#allocation5 + $0x190] sm:$0xff]
    %v273 = vld [vmem:[#allocation5 + $0x198] sm:$0xff]
    %v274 = vld [vmem:[#allocation5 + $0x1a0] sm:$0xff]
    %v275 = vld [vmem:[#allocation5 + $0x1a8] sm:$0xff]
    %v276 = vld [vmem:[#allocation5 + $0x1b0] sm:$0xff]
    %v277 = vld [vmem:[#allocation5 + $0x1b8] sm:$0xff]
    %v278 = vld [vmem:[#allocation5 + $0x1c0] sm:$0xff]
    %v279 = vld [vmem:[#allocation5 + $0x1c8] sm:$0xff]
    %v280 = vld [vmem:[#allocation5 + $0x1d0] sm:$0xff]
    %v281 = vld [vmem:[#allocation5 + $0x1d8] sm:$0xff]
    %v282 = vld [vmem:[#allocation5 + $0x1e0] sm:$0xff]
    %v283 = vld [vmem:[#allocation5 + $0x1e8] sm:$0xff]
    %v284 = vld [vmem:[#allocation5 + $0x1f0] sm:$0xff]
    %v285 = vld [vmem:[#allocation5 + $0x1f8] sm:$0xff]
    %v286 = vld [vmem:[%s6] sm:$0x3]
    %v288 = vperm.slane %v286, 0
    %v289 = vperm.slane %v286, 1
    %292 = vmatpush.msra.mxu0 %v252
    %293 = vmatpush.msra.mxu0 %v250
    %294 = vmatpush.msra.mxu0 %v248
    %295 = vmatpush.msra.mxu0 %v246
    %296 = vmatpush.msra.mxu0 %v244
    %297 = vmatpush.msra.mxu0 %v242
    %298 = vmatpush.msra.mxu0 %v240
    %299 = vmatpush.msra.mxu0 %v238
    %300 = vmatpush.msra.mxu0 %v236
    %301 = vmatpush.msra.mxu0 %v234
    %302 = vmatpush.msra.mxu0 %v232
    %303 = vmatpush.msra.mxu0 %v230
    %304 = vmatpush.msra.mxu0 %v228
    %305 = vmatpush.msra.mxu0 %v226
    %306 = vmatpush.msra.mxu0 %v224
    %307 = vmatpush.msra.mxu0 %v222
    %308 = vmatmul.f32.gmra.mxu0 %v220
    %v309 = vpop.f32.mrf.mxu0
    %v310 = vadd.f32 %v288, %v309
    %311 = vdwg.mxu0
    %312 = vmatpush.msra.mxu0 %v284
    %313 = vmatpush.msra.mxu0 %v282
    %314 = vmatpush.msra.mxu0 %v280
    %315 = vmatpush.msra.mxu0 %v278
    %316 = vmatpush.msra.mxu0 %v276
    %317 = vmatpush.msra.mxu0 %v274
    %318 = vmatpush.msra.mxu0 %v272
    %319 = vmatpush.msra.mxu0 %v270
    %320 = vmatpush.msra.mxu0 %v268
    %321 = vmatpush.msra.mxu0 %v266
    %322 = vmatpush.msra.mxu0 %v264
    %323 = vmatpush.msra.mxu0 %v262
    %324 = vmatpush.msra.mxu0 %v260
    %325 = vmatpush.msra.mxu0 %v258
    %326 = vmatpush.msra.mxu0 %v256
    %327 = vmatpush.msra.mxu0 %v254
    %328 = vmatmul.f32.gmra.mxu0 %v221
    %v329 = vpop.f32.mrf.mxu0
    %v330 = vadd.f32 %v310, %v329
    %331 = vdwg.mxu0
    %332 = vmatpush.msra.mxu0 %v253
    %333 = vmatpush.msra.mxu0 %v251
    %334 = vmatpush.msra.mxu0 %v249
    %335 = vmatpush.msra.mxu0 %v247
    %336 = vmatpush.msra.mxu0 %v245
    %337 = vmatpush.msra.mxu0 %v243
    %338 = vmatpush.msra.mxu0 %v241
    %339 = vmatpush.msra.mxu0 %v239
    %340 = vmatpush.msra.mxu0 %v237
    %341 = vmatpush.msra.mxu0 %v235
    %342 = vmatpush.msra.mxu0 %v233
    %343 = vmatpush.msra.mxu0 %v231
    %344 = vmatpush.msra.mxu0 %v229
    %345 = vmatpush.msra.mxu0 %v227
    %346 = vmatpush.msra.mxu0 %v225
    %347 = vmatpush.msra.mxu0 %v223
    %348 = vmatmul.f32.gmra.mxu0 %v220
    %v349 = vpop.f32.mrf.mxu0
    %v350 = vadd.f32 %v289, %v349
    %351 = vdwg.mxu0
    %352 = vmatpush.msra.mxu0 %v285
    %353 = vmatpush.msra.mxu0 %v283
    %354 = vmatpush.msra.mxu0 %v281
    %355 = vmatpush.msra.mxu0 %v279
    %356 = vmatpush.msra.mxu0 %v277
    %357 = vmatpush.msra.mxu0 %v275
    %358 = vmatpush.msra.mxu0 %v273
    %359 = vmatpush.msra.mxu0 %v271
    %360 = vmatpush.msra.mxu0 %v269
    %361 = vmatpush.msra.mxu0 %v267
    %362 = vmatpush.msra.mxu0 %v265
    %363 = vmatpush.msra.mxu0 %v263
    %364 = vmatpush.msra.mxu0 %v261
    %365 = vmatpush.msra.mxu0 %v259
    %366 = vmatpush.msra.mxu0 %v257
    %367 = vmatpush.msra.mxu0 %v255
    %368 = vmatmul.f32.gmra.mxu0 %v221
    %v369 = vpop.f32.mrf.mxu0
    %v370 = vadd.f32 %v350, %v369
    %371 = vdwg.mxu0
    %372 = vst [vmem:[#allocation7] sm:$0xff] %v330
    %373 = vst [vmem:[#allocation7 + $0x8] sm:$0xff] %v370
    %v374 = vld [vmem:[%s7] sm:$0xff]
    %v375 = vld [vmem:[%s7 + $0x8] sm:$0xff]
    %v376 = vld [vmem:[%s7 + $0x10] sm:$0xff]
    %v377 = vld [vmem:[%s7 + $0x18] sm:$0xff]
    %v378 = vld [vmem:[%s7 + $0x20] sm:$0xff]
    %v379 = vld [vmem:[%s7 + $0x28] sm:$0xff]
    %v380 = vld [vmem:[%s7 + $0x30] sm:$0xff]
    %v381 = vld [vmem:[%s7 + $0x38] sm:$0xff]
    %v382 = vld [vmem:[%s7 + $0x40] sm:$0xff]
    %v383 = vld [vmem:[%s7 + $0x48] sm:$0xff]
    %v384 = vld [vmem:[%s7 + $0x50] sm:$0xff]
    %v385 = vld [vmem:[%s7 + $0x58] sm:$0xff]
    %v386 = vld [vmem:[%s7 + $0x60] sm:$0xff]
    %v387 = vld [vmem:[%s7 + $0x68] sm:$0xff]
    %v388 = vld [vmem:[%s7 + $0x70] sm:$0xff]
    %v389 = vld [vmem:[%s7 + $0x78] sm:$0xff]
    %v390 = vld [vmem:[%s7 + $0x80] sm:$0xff]
    %v391 = vld [vmem:[%s7 + $0x88] sm:$0xff]
    %v392 = vld [vmem:[%s7 + $0x90] sm:$0xff]
    %v393 = vld [vmem:[%s7 + $0x98] sm:$0xff]
    %v394 = vld [vmem:[%s7 + $0xa0] sm:$0xff]
    %v395 = vld [vmem:[%s7 + $0xa8] sm:$0xff]
    %v396 = vld [vmem:[%s7 + $0xb0] sm:$0xff]
    %v397 = vld [vmem:[%s7 + $0xb8] sm:$0xff]
    %v398 = vld [vmem:[%s7 + $0xc0] sm:$0xff]
    %v399 = vld [vmem:[%s7 + $0xc8] sm:$0xff]
    %v400 = vld [vmem:[%s7 + $0xd0] sm:$0xff]
    %v401 = vld [vmem:[%s7 + $0xd8] sm:$0xff]
    %v402 = vld [vmem:[%s7 + $0xe0] sm:$0xff]
    %v403 = vld [vmem:[%s7 + $0xe8] sm:$0xff]
    %v404 = vld [vmem:[%s7 + $0xf0] sm:$0xff]
    %v405 = vld [vmem:[%s7 + $0xf8] sm:$0xff]
    %v406 = vld [vmem:[%s8] sm:$0x1]
    %v408 = vperm.slane %v406, 0
    %410 = vmatpush.msra.mxu0 %v389
    %411 = vmatpush.msra.mxu0 %v388
    %412 = vmatpush.msra.mxu0 %v387
    %413 = vmatpush.msra.mxu0 %v386
    %414 = vmatpush.msra.mxu0 %v385
    %415 = vmatpush.msra.mxu0 %v384
    %416 = vmatpush.msra.mxu0 %v383
    %417 = vmatpush.msra.mxu0 %v382
    %418 = vmatpush.msra.mxu0 %v381
    %419 = vmatpush.msra.mxu0 %v380
    %420 = vmatpush.msra.mxu0 %v379
    %421 = vmatpush.msra.mxu0 %v378
    %422 = vmatpush.msra.mxu0 %v377
    %423 = vmatpush.msra.mxu0 %v376
    %424 = vmatpush.msra.mxu0 %v375
    %425 = vmatpush.msra.mxu0 %v374
    %426 = vmatmul.f32.gmra.mxu0 %v220
    %v427 = vpop.f32.mrf.mxu0
    %v428 = vadd.f32 %v408, %v427
    %429 = vdwg.mxu0
    %430 = vmatpush.msra.mxu0 %v405
    %431 = vmatpush.msra.mxu0 %v404
    %432 = vmatpush.msra.mxu0 %v403
    %433 = vmatpush.msra.mxu0 %v402
    %434 = vmatpush.msra.mxu0 %v401
    %435 = vmatpush.msra.mxu0 %v400
    %436 = vmatpush.msra.mxu0 %v399
    %437 = vmatpush.msra.mxu0 %v398
    %438 = vmatpush.msra.mxu0 %v397
    %439 = vmatpush.msra.mxu0 %v396
    %440 = vmatpush.msra.mxu0 %v395
    %441 = vmatpush.msra.mxu0 %v394
    %442 = vmatpush.msra.mxu0 %v393
    %443 = vmatpush.msra.mxu0 %v392
    %444 = vmatpush.msra.mxu0 %v391
    %445 = vmatpush.msra.mxu0 %v390
    %446 = vmatmul.f32.gmra.mxu0 %v221
    %v447 = vpop.f32.mrf.mxu0
    %v448 = vadd.f32 %v428, %v447
    %449 = vdwg.mxu0
    %v450 = vlaneseq
    %v451 = vand.u32 %v450, 127
    %vm452 = vcmp.lt.s32.totalorder %v451, 14
    %v453 = vsel %vm452, %v448, -1e+30
    %vm454 = vcmask 130048
    %v455 = vsel %vm454, %v453, -inf
    %456 = vmax.xlane.f32.xlu0 %v455
    %v457 = vpop.xlane.xlu0 %456
    %v458 = vsub.f32 %v453, %v457
    %v459 = vmul.f32 %v458, 1.442695
    %v460 = vpow.pop %v459
    %v461 = vsel %vm454, %v460, 0.0
    %462 = vadd.xlane.f32.xlu0 %v461
    %v463 = vpop.xlane.xlu0 %462
    %v464 = vlog2.pop %v463
    %v465 = vmul.f32 %v464, 0.6931472
    %v466 = vadd.f32 %v457, %v465
    %v467 = vsel %vm452, -1e+30, %v448
    %v468 = vsel %vm454, %v467, -inf
    %469 = vmax.xlane.f32.xlu0 %v468
    %v470 = vpop.xlane.xlu0 %469
    %v471 = vsub.f32 %v467, %v470
    %v472 = vmul.f32 %v471, 1.442695
    %v473 = vpow.pop %v472
    %v474 = vsel %vm454, %v473, 0.0
    %475 = vadd.xlane.f32.xlu0 %v474
    %v476 = vpop.xlane.xlu0 %475
    %v477 = vlog2.pop %v476
    %v478 = vmul.f32 %v477, 0.6931472
    %v479 = vadd.f32 %v470, %v478
    %v480 = vld [vmem:[%s1] sm:$0xff]
    %481 = vset.pattern.permute.xlu0 0
    %482 = vperm.xlu0 %481, %v480
    %v483 = vpop.permute.xlu0 %482
    %vm484 = vcmp.eq.s32.totalorder %v451, %v483
    %v485 = vld [vmem:[%s2] sm:$0xff]
    %v486 = vadd.s32 %v485, 14
    %487 = vset.pattern.permute.xlu0 0
    %488 = vperm.xlu0 %487, %v486
    %v489 = vpop.permute.xlu0 %488
    %vm490 = vcmp.eq.s32.totalorder %v451, %v489
    %vm491 = vmor %vm484, %vm490
    %v492 = vsel %vm491, %v448, 0.0
    %v493 = vsel %vm454, %v492, 0.0
    %494 = vadd.xlane.f32.xlu0 %v493
    %v495 = vpop.xlane.xlu0 %494
    %v496 = vadd.f32 %v466, %v479
    %v497 = vsub.f32 %v496, %v495
    %vm498 = vcmask 7168
    %499 = vst.msk [vmem:[%s10] sm:$0xff] %vm498, %v497
    %vm500 = vcmp.eq.f32.partialorder %v448, %v457
    %vm501 = vmand %vm500, %vm452
    %v502 = vcvt.s32.f32 %v451
    %v503 = vsel %vm501, %v502, 16.0
    %v504 = vsel %vm454, %v503, inf
    %505 = vmin.xlane.f32.xlu0 %v504
    %v506 = vpop.xlane.xlu0 %505
    %v507 = vcvt.f32.s32.to.zero.pseudo %v506
    %508 = vst.msk [vmem:[%s11] sm:$0xff] %vm498, %v507
    // Predicated region
    $region46: #{tpu_custom_call.1} parent=1 // pred_check
      _
    $region47: #{tpu_custom_call.1} parent=1 // pred_check_branch
      %510 = sbr.rel (0) target = $region49
    $region48: #{tpu_custom_call.1} parent=1 // pred_region
      %512 = vsyncadd [#allocation4], 0
      %s514 = sshll.u32 [#allocation7], 4
      %s515 = int_to_ptr.vmem [resolvable:$true] %s514
      %s516 = sshll.u32 %s9, 4
      %s517 = int_to_ptr.hbm [resolvable:$true] %s516
      %519 = dma.vmem_to_hbm [thread:$0]  %s515, 256, %s517, [#allocation4]
    $region49: #{tpu_custom_call.1} parent=1 // pred_fallthru
      _
    // Predicated region
    $region50: #{tpu_custom_call.1} parent=1 // pred_check
      _
    $region51: #{tpu_custom_call.1} parent=1 // pred_check_branch
      %521 = sbr.rel (0) target = $region53
    $region52: #{tpu_custom_call.1} parent=1 // pred_region
      _
    $region53: #{tpu_custom_call.1} parent=1 // pred_fallthru
      _
    // Predicated region
    $region54: #{tpu_custom_call.1} parent=1 // pred_check
      _
    $region55: #{tpu_custom_call.1} parent=1 // pred_check_branch
      %523 = sbr.rel (0) target = $region57
    $region56: #{tpu_custom_call.1} parent=1 // pred_region
      _
    $region57: #{tpu_custom_call.1} parent=1 // pred_fallthru
      _
    // Predicated region
    $region58: #{tpu_custom_call.1} parent=1 // pred_check
      _
    $region59: #{tpu_custom_call.1} parent=1 // pred_check_branch
      %525 = sbr.rel (0) target = $region61
    $region60: #{tpu_custom_call.1} parent=1 // pred_region
      %527 = dma.done [#allocation4], 256
    $region61: #{tpu_custom_call.1} parent=1 // pred_fallthru
      _
    // Predicated region
    $region62: #{tpu_custom_call.1} parent=1 // pred_check
      _
    $region63: #{tpu_custom_call.1} parent=1 // pred_check_branch
      %529 = sbr.rel (0) target = $region65
    $region64: #{tpu_custom_call.1} parent=1 // pred_region
      _
    $region65: #{tpu_custom_call.1} parent=1 // pred_fallthru
      _
    // Predicated region
    $region66: #{tpu_custom_call.1} parent=1 // pred_check
      _
    $region67: #{tpu_custom_call.1} parent=1 // pred_check_branch
      %531 = sbr.rel (0) target = $region69
    $region68: #{tpu_custom_call.1} parent=1 // pred_region
      _
    $region69: #{tpu_custom_call.1} parent=1 // pred_fallthru
      _
    %532 = vsyncpa [#allocation3], 1
    %533 = vsyncpa [#allocation6], 1
    %534 = vsyncpa [#allocation4], 1

</llo_original>
